<compile_context>
chip_gen: v5e
topology: v5e:2x2
jax: 0.10.0
libtpu: 0.0.40
codegen_flags: <defaults>
</compile_context>

<pallas_src>
import jax
import jax.numpy as jnp
from jax.experimental import pallas as pl
from jax.experimental.pallas import tpu as pltpu


def _round_up(x: int, m: int) -> int:
    return ((x + m - 1) // m) * m


def _pick_feature_pad(d: int) -> int:
    """Pad a feature dim to 256 (full 2x256x256 MXU occupancy on v6e/v7x) when
    it costs <= 1/8 extra padding, otherwise to 128 (lane-dense minimum)."""
    d128 = _round_up(d, 128)
    d256 = _round_up(d, 256)
    return d256 if (d256 - d) * 8 <= d256 else d128


def _pick_tm(B: int, *, target_steps: int = 4, max_tm: int = 512):
    """Pick batch tile (tm) and padded batch (B_p).

    Pads B to a multiple of 8 first so batch-padding waste stays small, then
    prefers the largest tile <= max_tm that still gives >= target_steps grid
    steps (so both v7x TensorCores get work and the pipeline overlaps DMA with
    compute) without padding more than ~12.5% extra rows."""
    B8 = _round_up(max(B, 1), 8)
    candidates = [t for t in (512, 256, 128, 64, 32, 16, 8) if t <= max_tm]
    for tm in candidates:
        B_p = _round_up(B8, tm)
        if B_p // tm >= target_steps and (B_p - B8) * 8 <= B_p:
            return tm, B_p
    for tm in candidates:
        if B8 % tm == 0:
            return tm, B8
    return 8, B8


def _pick_vmem_limit() -> int:
    """~3/4 of physical per-core VMEM, capped at 100 MiB.
    -> ~96-100 MiB on v5e/v6e (128 MiB physical), ~48 MiB on v7x (64 MiB)."""
    try:
        cap = getattr(pltpu.get_tpu_info(), "vmem_capacity_bytes", None)
        if cap:
            return int(min(cap * 3 // 4, 100 * 1024 * 1024))
    except Exception:
        pass
    return 48 * 1024 * 1024  # conservative, safe on every generation


def mlp_kernel(x_ref, w1_ref, b1_ref, w2_ref, b2_ref, o_ref):
    # fc1: h = x @ W1 + b1  (bf16 operands on the MXU, f32 accumulation).
    h = jnp.dot(x_ref[...], w1_ref[...], preferred_element_type=jnp.float32)
    h = h + b1_ref[...]                       # (1, D_out_p) broadcasts over the tile
    # fc2: y = h @ W2 + b2
    y = jnp.dot(h.astype(jnp.bfloat16), w2_ref[...],
                preferred_element_type=jnp.float32)
    y = y + b2_ref[...]
    o_ref[...] = y.astype(o_ref.dtype)


def prepare_mlp_params(w1, b1, w2, b2):
    """One-time (init) layout: pad feature dims, cast weights to bf16.

    Weights are stored pre-transposed as (in_features, out_features) so the
    kernel computes plain x @ W + b, matching torch's fc2(fc1(x))."""
    d_in, d_out = w1.shape
    d_in_p = _pick_feature_pad(d_in)
    d_out_p = _pick_feature_pad(d_out)
    w1_p = jnp.pad(w1, ((0, d_in_p - d_in), (0, d_out_p - d_out))).astype(jnp.bfloat16)
    w2_p = jnp.pad(w2, ((0, d_out_p - d_out), (0, d_out_p - d_out))).astype(jnp.bfloat16)
    b1_p = jnp.pad(b1, (0, d_out_p - d_out)).reshape(1, d_out_p).astype(jnp.float32)
    b2_p = jnp.pad(b2, (0, d_out_p - d_out)).reshape(1, d_out_p).astype(jnp.float32)
    return {"w1": w1_p, "b1": b1_p, "w2": w2_p, "b2": b2_p,
            "d_in": d_in, "d_out": d_out, "d_in_p": d_in_p, "d_out_p": d_out_p}


def mlp_forward(x, params, *, out_dtype=jnp.float32):
    """x: (B, d_in) float32/bfloat16; params from prepare_mlp_params."""
    B, d_in = x.shape
    assert d_in == params["d_in"], "input feature dim mismatch"
    d_in_p, d_out_p, d_out = params["d_in_p"], params["d_out_p"], params["d_out"]

    tm, B_p = _pick_tm(B)

    # Stream x as bf16 (halves x HBM traffic); zero-pad to the tiled shape.
    x_p = x.astype(jnp.bfloat16)
    if (B_p, d_in_p) != (B, d_in):
        x_p = jnp.pad(x_p, ((0, B_p - B), (0, d_in_p - d_in)))

    grid = (B_p // tm,)
    vmem_limit = _pick_vmem_limit()

    def run(single_buffer_weights: bool):
        resident = (dict(pipeline_mode=pl.Buffered(buffer_count=1))
                    if single_buffer_weights else {})
        return pl.pallas_call(
            mlp_kernel,
            out_shape=jax.ShapeDtypeStruct((B_p, d_out_p), out_dtype),
            grid_spec=pltpu.PrefetchScalarGridSpec(
                num_scalar_prefetch=0,
                grid=grid,
                in_specs=[
                    # x tile marches over the batch; weights/biases stay resident.
                    pl.BlockSpec((tm, d_in_p), lambda i: (i, 0)),
                    pl.BlockSpec((d_in_p, d_out_p), lambda i: (0, 0), **resident),
                    pl.BlockSpec((1, d_out_p), lambda i: (0, 0), **resident),
                    pl.BlockSpec((d_out_p, d_out_p), lambda i: (0, 0), **resident),
                    pl.BlockSpec((1, d_out_p), lambda i: (0, 0), **resident),
                ],
                out_specs=pl.BlockSpec((tm, d_out_p), lambda i: (i, 0)),
            ),
            compiler_params=pltpu.CompilerParams(
                dimension_semantics=("parallel",),   # batch tiles split across TCs
                vmem_limit_bytes=vmem_limit,
            ),
        )(x_p, params["w1"], params["b1"], params["w2"], params["b2"])

    try:
        out = run(True)
    except Exception:
        # Fallback if this jax build rejects pipeline_mode / Buffered(1).
        out = run(False)
    return out[:B, :d_out]


# ----------------------------- references / test -----------------------------

def _ref_mlp_bf16(x, w1, b1, w2, b2):
    """Reference matching kernel numerics (bf16 operands, f32 accumulation)."""
    h = jnp.dot(x.astype(jnp.bfloat16), w1.astype(jnp.bfloat16),
                preferred_element_type=jnp.float32) + b1
    y = jnp.dot(h.astype(jnp.bfloat16), w2.astype(jnp.bfloat16),
                preferred_element_type=jnp.float32) + b2
    return y


def _ref_mlp_f32(x, w1, b1, w2, b2):
    return (x @ w1 + b1) @ w2 + b2


def _make_params(key, d_in, d_out):
    kw1, kb1, kw2, kb2 = jax.random.split(key, 4)
    bound1 = 1.0 / (d_in ** 0.5)
    bound2 = 1.0 / (d_out ** 0.5)
    w1 = jax.random.uniform(kw1, (d_in, d_out), jnp.float32, -bound1, bound1)
    b1 = jax.random.uniform(kb1, (d_out,), jnp.float32, -bound1, bound1)
    w2 = jax.random.uniform(kw2, (d_out, d_out), jnp.float32, -bound2, bound2)
    b2 = jax.random.uniform(kb2, (d_out,), jnp.float32, -bound2, bound2)
    return w1, b1, w2, b2


if __name__ == "__main__":
    key = jax.random.PRNGKey(0)
    k1, k2, k3, k4 = jax.random.split(key, 4)

    # Case 1: tiny shapes implied by the module (padding path, grid of 1).
    B1, D_IN1, D_OUT1 = 8, 32, 32
    x1 = jax.random.normal(k1, (B1, D_IN1), dtype=jnp.float32)
    w1a, b1a, w2a, b2a = _make_params(k2, D_IN1, D_OUT1)
    params1 = prepare_mlp_params(w1a, b1a, w2a, b2a)
    out1 = jax.block_until_ready(mlp_forward(x1, params1))
    ref1_bf16 = _ref_mlp_bf16(x1, w1a, b1a, w2a, b2a)
    ref1_f32 = _ref_mlp_f32(x1, w1a, b1a, w2a, b2a)
    assert out1.shape == (B1, D_OUT1)
    assert jnp.allclose(out1, ref1_bf16, atol=1e-4, rtol=1e-4)
    assert jnp.allclose(out1, ref1_f32, atol=3e-2, rtol=3e-2)

    # Case 2: lane-dense, batch-tiled (grid > 1, "parallel" across TensorCores).
    B2, D_IN2, D_OUT2 = 384, 128, 128
    x2 = jax.random.normal(k3, (B2, D_IN2), dtype=jnp.float32)
    w1b, b1b, w2b, b2b = _make_params(k4, D_IN2, D_OUT2)
    params2 = prepare_mlp_params(w1b, b1b, w2b, b2b)
    out2 = jax.block_until_ready(mlp_forward(x2, params2))
    ref2_bf16 = _ref_mlp_bf16(x2, w1b, b1b, w2b, b2b)
    ref2_f32 = _ref_mlp_f32(x2, w1b, b1b, w2b, b2b)
    assert out2.shape == (B2, D_OUT2)
    assert jnp.allclose(out2, ref2_bf16, atol=1e-4, rtol=1e-4)
    assert jnp.allclose(out2, ref2_f32, atol=3e-2, rtol=3e-2)

    print("KERNEL_OK")
</pallas_src>

<mosaic_0001>
module attributes {stable_mosaic.version = 11 : i64} {
  func.func @mlp_kernel(%arg0: i32, %arg1: memref<8x128xbf16, #tpu.memory_space<vmem>>, %arg2: memref<128x128xbf16, #tpu.memory_space<vmem>>, %arg3: memref<1x128xf32, #tpu.memory_space<vmem>>, %arg4: memref<128x128xbf16, #tpu.memory_space<vmem>>, %arg5: memref<1x128xf32, #tpu.memory_space<vmem>>, %arg6: memref<8x128xf32, #tpu.memory_space<vmem>>) attributes {dimension_semantics = [#tpu.dimension_semantics<parallel>], iteration_bounds = array<i64: 1>, scalar_prefetch = 0 : i64, scratch_operands = 0 : i64, tpu.core_type = #tpu.core_type<tc>, window_params = [{transform_indices = @transform_0, window_bounds = array<i64: 8, 128>}, {pipeline_mode = #tpu.pipeline_mode<synchronous>, transform_indices = @transform_1, window_bounds = array<i64: 128, 128>}, {pipeline_mode = #tpu.pipeline_mode<synchronous>, transform_indices = @transform_2, window_bounds = array<i64: 1, 128>}, {pipeline_mode = #tpu.pipeline_mode<synchronous>, transform_indices = @transform_3, window_bounds = array<i64: 128, 128>}, {pipeline_mode = #tpu.pipeline_mode<synchronous>, transform_indices = @transform_4, window_bounds = array<i64: 1, 128>}, {transform_indices = @transform_5, window_bounds = array<i64: 8, 128>}]} {
    %c0 = arith.constant 0 : index
    %c0_0 = arith.constant 0 : index
    %0 = vector.load %arg1[%c0, %c0_0] : memref<8x128xbf16, #tpu.memory_space<vmem>>, vector<8x128xbf16>
    %c0_1 = arith.constant 0 : index
    %c0_2 = arith.constant 0 : index
    %1 = vector.load %arg2[%c0_1, %c0_2] : memref<128x128xbf16, #tpu.memory_space<vmem>>, vector<128x128xbf16>
    %cst = arith.constant dense<0.000000e+00> : vector<8x128xf32>
    %2 = tpu.matmul %0, %1, %cst {dimension_numbers = #tpu.dot_dimension_numbers<[1], [0], [0], [1], [0, 0, 1, 1], [], []>} : vector<8x128xbf16>, vector<128x128xbf16>, vector<8x128xf32> -> vector<8x128xf32>
    %c0_3 = arith.constant 0 : index
    %c0_4 = arith.constant 0 : index
    %3 = vector.load %arg3[%c0_3, %c0_4] : memref<1x128xf32, #tpu.memory_space<vmem>>, vector<1x128xf32>
    %4 = vector.broadcast %3 : vector<1x128xf32> to vector<8x128xf32>
    %5 = arith.addf %2, %4 : vector<8x128xf32>
    %6 = arith.truncf %5 : vector<8x128xf32> to vector<8x128xbf16>
    %c0_5 = arith.constant 0 : index
    %c0_6 = arith.constant 0 : index
    %7 = vector.load %arg4[%c0_5, %c0_6] : memref<128x128xbf16, #tpu.memory_space<vmem>>, vector<128x128xbf16>
    %cst_7 = arith.constant dense<0.000000e+00> : vector<8x128xf32>
    %8 = tpu.matmul %6, %7, %cst_7 {dimension_numbers = #tpu.dot_dimension_numbers<[1], [0], [0], [1], [0, 0, 1, 1], [], []>} : vector<8x128xbf16>, vector<128x128xbf16>, vector<8x128xf32> -> vector<8x128xf32>
    %c0_8 = arith.constant 0 : index
    %c0_9 = arith.constant 0 : index
    %9 = vector.load %arg5[%c0_8, %c0_9] : memref<1x128xf32, #tpu.memory_space<vmem>>, vector<1x128xf32>
    %10 = vector.broadcast %9 : vector<1x128xf32> to vector<8x128xf32>
    %11 = arith.addf %8, %10 : vector<8x128xf32>
    %c0_10 = arith.constant 0 : index
    %c0_11 = arith.constant 0 : index
    %12 = vector.load %arg6[%c0_10, %c0_11] : memref<8x128xf32, #tpu.memory_space<vmem>>, vector<8x128xf32>
    tpu.vector_store %arg6[%c0_10, %c0_11], %11 {strides = array<i32>} : memref<8x128xf32, #tpu.memory_space<vmem>>, vector<8x128xf32>,
    return
  }
  func.func @transform_0(%arg0: i32) -> (i32, i32) {
    %c0_i32 = arith.constant 0 : i32
    %c0_i32_0 = arith.constant 0 : i32
    return %arg0, %c0_i32 : i32, i32
  }
  func.func @transform_1(%arg0: i32) -> (i32, i32) {
    %c0_i32 = arith.constant 0 : i32
    %c0_i32_0 = arith.constant 0 : i32
    %c0_i32_1 = arith.constant 0 : i32
    return %c0_i32, %c0_i32_0 : i32, i32
  }
  func.func @transform_2(%arg0: i32) -> (i32, i32) {
    %c0_i32 = arith.constant 0 : i32
    %c0_i32_0 = arith.constant 0 : i32
    %c0_i32_1 = arith.constant 0 : i32
    return %c0_i32, %c0_i32_0 : i32, i32
  }
  func.func @transform_3(%arg0: i32) -> (i32, i32) {
    %c0_i32 = arith.constant 0 : i32
    %c0_i32_0 = arith.constant 0 : i32
    %c0_i32_1 = arith.constant 0 : i32
    return %c0_i32, %c0_i32_0 : i32, i32
  }
  func.func @transform_4(%arg0: i32) -> (i32, i32) {
    %c0_i32 = arith.constant 0 : i32
    %c0_i32_0 = arith.constant 0 : i32
    %c0_i32_1 = arith.constant 0 : i32
    return %c0_i32, %c0_i32_0 : i32, i32
  }
  func.func @transform_5(%arg0: i32) -> (i32, i32) {
    %c0_i32 = arith.constant 0 : i32
    %c0_i32_0 = arith.constant 0 : i32
    return %arg0, %c0_i32 : i32, i32
  }
}

module attributes {stable_mosaic.version = 11 : i64} {
  func.func @mlp_kernel(%arg0: i32, %arg1: memref<8x128xbf16, #tpu.memory_space<vmem>>, %arg2: memref<128x128xbf16, #tpu.memory_space<vmem>>, %arg3: memref<1x128xf32, #tpu.memory_space<vmem>>, %arg4: memref<128x128xbf16, #tpu.memory_space<vmem>>, %arg5: memref<1x128xf32, #tpu.memory_space<vmem>>, %arg6: memref<8x128xf32, #tpu.memory_space<vmem>>) attributes {dimension_semantics = [#tpu.dimension_semantics<parallel>], iteration_bounds = array<i64: 1>, scalar_prefetch = 0 : i64, scratch_operands = 0 : i64, tpu.core_type = #tpu.core_type<tc>, window_params = [{transform_indices = @transform_0, window_bounds = array<i64: 8, 128>}, {pipeline_mode = #tpu.pipeline_mode<synchronous>, transform_indices = @transform_1, window_bounds = array<i64: 128, 128>}, {pipeline_mode = #tpu.pipeline_mode<synchronous>, transform_indices = @transform_2, window_bounds = array<i64: 1, 128>}, {pipeline_mode = #tpu.pipeline_mode<synchronous>, transform_indices = @transform_3, window_bounds = array<i64: 128, 128>}, {pipeline_mode = #tpu.pipeline_mode<synchronous>, transform_indices = @transform_4, window_bounds = array<i64: 1, 128>}, {transform_indices = @transform_5, window_bounds = array<i64: 8, 128>}]} {
    %c0 = arith.constant 0 : index
    %c0_0 = arith.constant 0 : index
    %0 = vector.load %arg1[%c0, %c0_0] : memref<8x128xbf16, #tpu.memory_space<vmem>>, vector<8x128xbf16>
    %c0_1 = arith.constant 0 : index
    %c0_2 = arith.constant 0 : index
    %1 = vector.load %arg2[%c0_1, %c0_2] : memref<128x128xbf16, #tpu.memory_space<vmem>>, vector<128x128xbf16>
    %cst = arith.constant dense<0.000000e+00> : vector<8x128xf32>
    %2 = tpu.matmul %0, %1, %cst {dimension_numbers = #tpu.dot_dimension_numbers<[1], [0], [0], [1], [0, 0, 1, 1], [], []>} : vector<8x128xbf16>, vector<128x128xbf16>, vector<8x128xf32> -> vector<8x128xf32>
    %c0_3 = arith.constant 0 : index
    %c0_4 = arith.constant 0 : index
    %3 = vector.load %arg3[%c0_3, %c0_4] : memref<1x128xf32, #tpu.memory_space<vmem>>, vector<1x128xf32>
    %4 = vector.broadcast %3 : vector<1x128xf32> to vector<8x128xf32>
    %5 = arith.addf %2, %4 : vector<8x128xf32>
    %6 = arith.truncf %5 : vector<8x128xf32> to vector<8x128xbf16>
    %c0_5 = arith.constant 0 : index
    %c0_6 = arith.constant 0 : index
    %7 = vector.load %arg4[%c0_5, %c0_6] : memref<128x128xbf16, #tpu.memory_space<vmem>>, vector<128x128xbf16>
    %cst_7 = arith.constant dense<0.000000e+00> : vector<8x128xf32>
    %8 = tpu.matmul %6, %7, %cst_7 {dimension_numbers = #tpu.dot_dimension_numbers<[1], [0], [0], [1], [0, 0, 1, 1], [], []>} : vector<8x128xbf16>, vector<128x128xbf16>, vector<8x128xf32> -> vector<8x128xf32>
    %c0_8 = arith.constant 0 : index
    %c0_9 = arith.constant 0 : index
    %9 = vector.load %arg5[%c0_8, %c0_9] : memref<1x128xf32, #tpu.memory_space<vmem>>, vector<1x128xf32>
    %10 = vector.broadcast %9 : vector<1x128xf32> to vector<8x128xf32>
    %11 = arith.addf %8, %10 : vector<8x128xf32>
    %c0_10 = arith.constant 0 : index
    %c0_11 = arith.constant 0 : index
    %12 = vector.load %arg6[%c0_10, %c0_11] : memref<8x128xf32, #tpu.memory_space<vmem>>, vector<8x128xf32>
    tpu.vector_store %arg6[%c0_10, %c0_11], %11 {strides = array<i32>} : memref<8x128xf32, #tpu.memory_space<vmem>>, vector<8x128xf32>,
    return
  }
  func.func @transform_0(%arg0: i32) -> (i32, i32) {
    %c0_i32 = arith.constant 0 : i32
    %c0_i32_0 = arith.constant 0 : i32
    return %arg0, %c0_i32 : i32, i32
  }
  func.func @transform_1(%arg0: i32) -> (i32, i32) {
    %c0_i32 = arith.constant 0 : i32
    %c0_i32_0 = arith.constant 0 : i32
    %c0_i32_1 = arith.constant 0 : i32
    return %c0_i32, %c0_i32_0 : i32, i32
  }
  func.func @transform_2(%arg0: i32) -> (i32, i32) {
    %c0_i32 = arith.constant 0 : i32
    %c0_i32_0 = arith.constant 0 : i32
    %c0_i32_1 = arith.constant 0 : i32
    return %c0_i32, %c0_i32_0 : i32, i32
  }
  func.func @transform_3(%arg0: i32) -> (i32, i32) {
    %c0_i32 = arith.constant 0 : i32
    %c0_i32_0 = arith.constant 0 : i32
    %c0_i32_1 = arith.constant 0 : i32
    return %c0_i32, %c0_i32_0 : i32, i32
  }
  func.func @transform_4(%arg0: i32) -> (i32, i32) {
    %c0_i32 = arith.constant 0 : i32
    %c0_i32_0 = arith.constant 0 : i32
    %c0_i32_1 = arith.constant 0 : i32
    return %c0_i32, %c0_i32_0 : i32, i32
  }
  func.func @transform_5(%arg0: i32) -> (i32, i32) {
    %c0_i32 = arith.constant 0 : i32
    %c0_i32_0 = arith.constant 0 : i32
    return %arg0, %c0_i32 : i32, i32
  }
}

</mosaic_0001>

<llo_original>
// kernel: tpu_custom_call.1
$region0: #{tpu_custom_call.1}
  #allocation0 [shape = 'u32[]', space=smem, size = 0x4, offset = 0x4, fixed_abs, tag = 'smem constant byte address 0x4 - core index']
  #allocation1 [shape = 'u32[72,128]{1,0:T(1,128)}', space=vmem, size = 0x9000, scoped, tag = 'internal scratch']
  %s0 = inlined_call_operand.hbm [shape: bf16[8,128], index: 0, kind: input, shape index: {}]
  %s1 = inlined_call_operand.hbm [shape: bf16[128,128], index: 1, kind: input, shape index: {}]
  %s2 = inlined_call_operand.vmem [shape: f32[1,128], index: 2, kind: input, shape index: {}]
  %s3 = inlined_call_operand.hbm [shape: bf16[128,128], index: 3, kind: input, shape index: {}]
  %s4 = inlined_call_operand.vmem [shape: f32[1,128], index: 4, kind: input, shape index: {}]
  %s5 = inlined_call_operand.hbm [shape: f32[8,128], index: 5, kind: output, shape index: {}]
  %s6 = sld [smem:[#allocation0]]
  $region42: #{tpu_custom_call.1} parent=0
    _
  %s8 = ssub.s32 1, %s6
  %s9 = scalar_select 0, %s8, %s6
  $region1: #{tpu_custom_call.1} parent=0
    #allocation2 [shape = 'u8[2048]{0}', space=vmem, size = 0x800, scoped, tag = 'input window, operand 0, single buffered']
    #allocation3 [shape = 's32[1]{0}', space=sflag, size = 0x4, scoped, tag = 'scoped memory for tpu_custom_call.1']
    #allocation4 [shape = 's32[1]{0}', space=sflag, size = 0x4, scoped, tag = 'scoped memory for tpu_custom_call.1']
    #allocation5 [shape = 'u8[32768]{0}', space=vmem, size = 0x8000, scoped, tag = 'input window, operand 1, single buffered']
    #allocation6 [shape = 's32[1]{0}', space=sflag, size = 0x4, scoped, tag = 'scoped memory for tpu_custom_call.1']
    #allocation7 [shape = 'u8[32768]{0}', space=vmem, size = 0x8000, scoped, tag = 'input window, operand 3, single buffered']
    #allocation8 [shape = 'u8[4096]{0}', space=vmem, size = 0x1000, scoped, tag = 'output window, operand 0, single buffered']
    %10 = vsyncpa [#allocation3], 0
    %11 = vsyncpa [#allocation6], 0
    %12 = vsyncpa [#allocation4], 0
    // Predicated region
    $region2: #{tpu_custom_call.1} parent=1 // pred_check
      _
    $region3: #{tpu_custom_call.1} parent=1 // pred_check_branch
      %14 = sbr.rel (0) target = $region5
    $region4: #{tpu_custom_call.1} parent=1 // pred_region
      %16 = vsyncadd [#allocation3], 0
      %s18 = sshll.u32 %s0, 4
      %s19 = int_to_ptr.hbm [resolvable:$true] %s18
      %s20 = sshll.u32 [#allocation2], 4
      %s21 = int_to_ptr.vmem [resolvable:$true] %s20
      %23 = dma.hbm_to_vmem [thread:$0]  %s19, 64, %s21, [#allocation3]
    $region5: #{tpu_custom_call.1} parent=1 // pred_fallthru
      _
    // Predicated region
    $region6: #{tpu_custom_call.1} parent=1 // pred_check
      _
    $region7: #{tpu_custom_call.1} parent=1 // pred_check_branch
      %25 = sbr.rel (0) target = $region9
    $region8: #{tpu_custom_call.1} parent=1 // pred_region
      %27 = vsyncadd [#allocation6], 0
      %s28 = sshll.u32 %s1, 4
      %s29 = int_to_ptr.hbm [resolvable:$true] %s28
      %s30 = sshll.u32 [#allocation5], 4
      %s31 = int_to_ptr.vmem [resolvable:$true] %s30
      %36 = dma.hbm_to_vmem [thread:$0]  %s29, 1024, %s31, [#allocation6], 64, 64, 4
    $region9: #{tpu_custom_call.1} parent=1 // pred_fallthru
      _
    // Predicated region
    $region10: #{tpu_custom_call.1} parent=1 // pred_check
      _
    $region11: #{tpu_custom_call.1} parent=1 // pred_check_branch
      %38 = sbr.rel (0) target = $region13
    $region12: #{tpu_custom_call.1} parent=1 // pred_region
      _
    $region13: #{tpu_custom_call.1} parent=1 // pred_fallthru
      _
    // Predicated region
    $region14: #{tpu_custom_call.1} parent=1 // pred_check
      _
    $region15: #{tpu_custom_call.1} parent=1 // pred_check_branch
      %40 = sbr.rel (0) target = $region17
    $region16: #{tpu_custom_call.1} parent=1 // pred_region
      %42 = vsyncadd [#allocation6], 0
      %s43 = sshll.u32 %s3, 4
      %s44 = int_to_ptr.hbm [resolvable:$true] %s43
      %s45 = sshll.u32 [#allocation7], 4
      %s46 = int_to_ptr.vmem [resolvable:$true] %s45
      %51 = dma.hbm_to_vmem [thread:$0]  %s44, 1024, %s46, [#allocation6], 64, 64, 4
    $region17: #{tpu_custom_call.1} parent=1 // pred_fallthru
      _
    // Predicated region
    $region18: #{tpu_custom_call.1} parent=1 // pred_check
      _
    $region19: #{tpu_custom_call.1} parent=1 // pred_check_branch
      %53 = sbr.rel (0) target = $region21
    $region20: #{tpu_custom_call.1} parent=1 // pred_region
      _
    $region21: #{tpu_custom_call.1} parent=1 // pred_fallthru
      _
    // Predicated region
    $region22: #{tpu_custom_call.1} parent=1 // pred_check
      _
    $region23: #{tpu_custom_call.1} parent=1 // pred_check_branch
      %55 = sbr.rel (0) target = $region25
    $region24: #{tpu_custom_call.1} parent=1 // pred_region
      %57 = dma.done [#allocation3], 64
    $region25: #{tpu_custom_call.1} parent=1 // pred_fallthru
      _
    // Predicated region
    $region26: #{tpu_custom_call.1} parent=1 // pred_check
      _
    $region27: #{tpu_custom_call.1} parent=1 // pred_check_branch
      %59 = sbr.rel (0) target = $region29
    $region28: #{tpu_custom_call.1} parent=1 // pred_region
      %61 = dma.done [#allocation6], 1024
    $region29: #{tpu_custom_call.1} parent=1 // pred_fallthru
      _
    // Predicated region
    $region30: #{tpu_custom_call.1} parent=1 // pred_check
      _
    $region31: #{tpu_custom_call.1} parent=1 // pred_check_branch
      %63 = sbr.rel (0) target = $region33
    $region32: #{tpu_custom_call.1} parent=1 // pred_region
      %65 = dma.done [#allocation6], 1024
    $region33: #{tpu_custom_call.1} parent=1 // pred_fallthru
      _
    %v66 = vld [vmem:[#allocation2] sm:$0xf]
    %v67 = vld [vmem:[#allocation5] sm:$0xf]
    %v68 = vld [vmem:[#allocation5 + $0x4] sm:$0xf]
    %v69 = vld [vmem:[#allocation5 + $0x8] sm:$0xf]
    %v70 = vld [vmem:[#allocation5 + $0xc] sm:$0xf]
    %v71 = vld [vmem:[#allocation5 + $0x10] sm:$0xf]
    %v72 = vld [vmem:[#allocation5 + $0x14] sm:$0xf]
    %v73 = vld [vmem:[#allocation5 + $0x18] sm:$0xf]
    %v74 = vld [vmem:[#allocation5 + $0x1c] sm:$0xf]
    %v75 = vld [vmem:[#allocation5 + $0x20] sm:$0xf]
    %v76 = vld [vmem:[#allocation5 + $0x24] sm:$0xf]
    %v77 = vld [vmem:[#allocation5 + $0x28] sm:$0xf]
    %v78 = vld [vmem:[#allocation5 + $0x2c] sm:$0xf]
    %v79 = vld [vmem:[#allocation5 + $0x30] sm:$0xf]
    %v80 = vld [vmem:[#allocation5 + $0x34] sm:$0xf]
    %v81 = vld [vmem:[#allocation5 + $0x38] sm:$0xf]
    %v82 = vld [vmem:[#allocation5 + $0x3c] sm:$0xf]
    %v83 = vld [vmem:[%s2] sm:$0x1]
    %v85 = vperm.slane %v83, 0
    %v103 = vunpack.c.l.b16 %v67
    %v104 = vunpack.c.l.b16 %v68
    %v105 = vunpack.c.l.b16 %v69
    %v106 = vunpack.c.l.b16 %v70
    %v107 = vunpack.c.l.b16 %v71
    %v108 = vunpack.c.l.b16 %v72
    %v109 = vunpack.c.l.b16 %v73
    %v110 = vunpack.c.l.b16 %v74
    %v111 = vunpack.c.l.b16 %v75
    %v112 = vunpack.c.l.b16 %v76
    %v113 = vunpack.c.l.b16 %v77
    %v114 = vunpack.c.l.b16 %v78
    %v115 = vunpack.c.l.b16 %v79
    %v116 = vunpack.c.l.b16 %v80
    %v117 = vunpack.c.l.b16 %v81
    %v118 = vunpack.c.l.b16 %v82
    %v119 = vpack.c.b16 %v104, %v103
    %v120 = vpack.c.b16 %v106, %v105
    %v121 = vpack.c.b16 %v108, %v107
    %v122 = vpack.c.b16 %v110, %v109
    %v123 = vpack.c.b16 %v112, %v111
    %v124 = vpack.c.b16 %v114, %v113
    %v125 = vpack.c.b16 %v116, %v115
    %v126 = vpack.c.b16 %v118, %v117
    %135 = vmatpush.bf16.msra.mxu0 %v126
    %136 = vmatpush.bf16.msra.mxu0 %v125
    %137 = vmatpush.bf16.msra.mxu0 %v124
    %138 = vmatpush.bf16.msra.mxu0 %v123
    %139 = vmatpush.bf16.msra.mxu0 %v122
    %140 = vmatpush.bf16.msra.mxu0 %v121
    %141 = vmatpush.bf16.msra.mxu0 %v120
    %142 = vmatpush.bf16.msra.mxu0 %v119
    %143 = vmatmul.bf16.gmra.mxu0 %v66
    %v144 = vpop.f32.mrf.mxu0
    %v145 = vadd.f32 %v85, %v144
    %v146 = vpop.f32.mrf.mxu0
    %147 = vdwg.mxu0
    %v148 = vpack.c.bf16 %v145, %v145
    %v149 = vld [vmem:[#allocation7] sm:$0xf]
    %v150 = vld [vmem:[#allocation7 + $0x4] sm:$0xf]
    %v151 = vld [vmem:[#allocation7 + $0x8] sm:$0xf]
    %v152 = vld [vmem:[#allocation7 + $0xc] sm:$0xf]
    %v153 = vld [vmem:[#allocation7 + $0x10] sm:$0xf]
    %v154 = vld [vmem:[#allocation7 + $0x14] sm:$0xf]
    %v155 = vld [vmem:[#allocation7 + $0x18] sm:$0xf]
    %v156 = vld [vmem:[#allocation7 + $0x1c] sm:$0xf]
    %v157 = vld [vmem:[#allocation7 + $0x20] sm:$0xf]
    %v158 = vld [vmem:[#allocation7 + $0x24] sm:$0xf]
    %v159 = vld [vmem:[#allocation7 + $0x28] sm:$0xf]
    %v160 = vld [vmem:[#allocation7 + $0x2c] sm:$0xf]
    %v161 = vld [vmem:[#allocation7 + $0x30] sm:$0xf]
    %v162 = vld [vmem:[#allocation7 + $0x34] sm:$0xf]
    %v163 = vld [vmem:[#allocation7 + $0x38] sm:$0xf]
    %v164 = vld [vmem:[#allocation7 + $0x3c] sm:$0xf]
    %v165 = vld [vmem:[%s4] sm:$0x1]
    %v167 = vperm.slane %v165, 0
    %v185 = vunpack.c.l.b16 %v149
    %v186 = vunpack.c.l.b16 %v150
    %v187 = vunpack.c.l.b16 %v151
    %v188 = vunpack.c.l.b16 %v152
    %v189 = vunpack.c.l.b16 %v153
    %v190 = vunpack.c.l.b16 %v154
    %v191 = vunpack.c.l.b16 %v155
    %v192 = vunpack.c.l.b16 %v156
    %v193 = vunpack.c.l.b16 %v157
    %v194 = vunpack.c.l.b16 %v158
    %v195 = vunpack.c.l.b16 %v159
    %v196 = vunpack.c.l.b16 %v160
    %v197 = vunpack.c.l.b16 %v161
    %v198 = vunpack.c.l.b16 %v162
    %v199 = vunpack.c.l.b16 %v163
    %v200 = vunpack.c.l.b16 %v164
    %v201 = vpack.c.b16 %v186, %v185
    %v202 = vpack.c.b16 %v188, %v187
    %v203 = vpack.c.b16 %v190, %v189
    %v204 = vpack.c.b16 %v192, %v191
    %v205 = vpack.c.b16 %v194, %v193
    %v206 = vpack.c.b16 %v196, %v195
    %v207 = vpack.c.b16 %v198, %v197
    %v208 = vpack.c.b16 %v200, %v199
    %217 = vmatpush.bf16.msra.mxu0 %v208
    %218 = vmatpush.bf16.msra.mxu0 %v207
    %219 = vmatpush.bf16.msra.mxu0 %v206
    %220 = vmatpush.bf16.msra.mxu0 %v205
    %221 = vmatpush.bf16.msra.mxu0 %v204
    %222 = vmatpush.bf16.msra.mxu0 %v203
    %223 = vmatpush.bf16.msra.mxu0 %v202
    %224 = vmatpush.bf16.msra.mxu0 %v201
    %225 = vmatmul.bf16.gmra.mxu0 %v148
    %v226 = vpop.f32.mrf.mxu0
    %v227 = vadd.f32 %v167, %v226
    %v228 = vpop.f32.mrf.mxu0
    %229 = vdwg.mxu0
    %230 = vst [vmem:[#allocation8] sm:$0xff] %v227
    // Predicated region
    $region34: #{tpu_custom_call.1} parent=1 // pred_check
      _
    $region35: #{tpu_custom_call.1} parent=1 // pred_check_branch
      %232 = sbr.rel (0) target = $region37
    $region36: #{tpu_custom_call.1} parent=1 // pred_region
      %234 = vsyncadd [#allocation4], 0
      %s236 = sshll.u32 [#allocation8], 4
      %s237 = int_to_ptr.vmem [resolvable:$true] %s236
      %s238 = sshll.u32 %s5, 4
      %s239 = int_to_ptr.hbm [resolvable:$true] %s238
      %241 = dma.vmem_to_hbm [thread:$0]  %s237, 128, %s239, [#allocation4]
    $region37: #{tpu_custom_call.1} parent=1 // pred_fallthru
      _
    // Predicated region
    $region38: #{tpu_custom_call.1} parent=1 // pred_check
      _
    $region39: #{tpu_custom_call.1} parent=1 // pred_check_branch
      %243 = sbr.rel (0) target = $region41
    $region40: #{tpu_custom_call.1} parent=1 // pred_region
      %245 = dma.done [#allocation4], 128
    $region41: #{tpu_custom_call.1} parent=1 // pred_fallthru
      _
    %246 = vsyncpa [#allocation3], 1
    %247 = vsyncpa [#allocation6], 1
    %248 = vsyncpa [#allocation4], 1

// kernel: tpu_custom_call.1
$region0: #{tpu_custom_call.1}
  #allocation0 [shape = 'u32[]', space=smem, size = 0x4, offset = 0x4, fixed_abs, tag = 'smem constant byte address 0x4 - core index']
  #allocation1 [shape = 'u32[72,128]{1,0:T(1,128)}', space=vmem, size = 0x9000, scoped, tag = 'internal scratch']
  %s0 = inlined_call_operand.hbm [shape: bf16[8,128], index: 0, kind: input, shape index: {}]
  %s1 = inlined_call_operand.hbm [shape: bf16[128,128], index: 1, kind: input, shape index: {}]
  %s2 = inlined_call_operand.vmem [shape: f32[1,128], index: 2, kind: input, shape index: {}]
  %s3 = inlined_call_operand.hbm [shape: bf16[128,128], index: 3, kind: input, shape index: {}]
  %s4 = inlined_call_operand.vmem [shape: f32[1,128], index: 4, kind: input, shape index: {}]
  %s5 = inlined_call_operand.hbm [shape: f32[8,128], index: 5, kind: output, shape index: {}]
  %s6 = sld [smem:[#allocation0]]
  $region42: #{tpu_custom_call.1} parent=0
    _
  %s8 = ssub.s32 1, %s6
  %s9 = scalar_select 0, %s8, %s6
  $region1: #{tpu_custom_call.1} parent=0
    #allocation2 [shape = 'u8[2048]{0}', space=vmem, size = 0x800, scoped, tag = 'input window, operand 0, single buffered']
    #allocation3 [shape = 's32[1]{0}', space=sflag, size = 0x4, scoped, tag = 'scoped memory for tpu_custom_call.1']
    #allocation4 [shape = 's32[1]{0}', space=sflag, size = 0x4, scoped, tag = 'scoped memory for tpu_custom_call.1']
    #allocation5 [shape = 'u8[32768]{0}', space=vmem, size = 0x8000, scoped, tag = 'input window, operand 1, single buffered']
    #allocation6 [shape = 's32[1]{0}', space=sflag, size = 0x4, scoped, tag = 'scoped memory for tpu_custom_call.1']
    #allocation7 [shape = 'u8[32768]{0}', space=vmem, size = 0x8000, scoped, tag = 'input window, operand 3, single buffered']
    #allocation8 [shape = 'u8[4096]{0}', space=vmem, size = 0x1000, scoped, tag = 'output window, operand 0, single buffered']
    %10 = vsyncpa [#allocation3], 0
    %11 = vsyncpa [#allocation6], 0
    %12 = vsyncpa [#allocation4], 0
    // Predicated region
    $region2: #{tpu_custom_call.1} parent=1 // pred_check
      _
    $region3: #{tpu_custom_call.1} parent=1 // pred_check_branch
      %14 = sbr.rel (0) target = $region5
    $region4: #{tpu_custom_call.1} parent=1 // pred_region
      %16 = vsyncadd [#allocation3], 0
      %s18 = sshll.u32 %s0, 4
      %s19 = int_to_ptr.hbm [resolvable:$true] %s18
      %s20 = sshll.u32 [#allocation2], 4
      %s21 = int_to_ptr.vmem [resolvable:$true] %s20
      %23 = dma.hbm_to_vmem [thread:$0]  %s19, 64, %s21, [#allocation3]
    $region5: #{tpu_custom_call.1} parent=1 // pred_fallthru
      _
    // Predicated region
    $region6: #{tpu_custom_call.1} parent=1 // pred_check
      _
    $region7: #{tpu_custom_call.1} parent=1 // pred_check_branch
      %25 = sbr.rel (0) target = $region9
    $region8: #{tpu_custom_call.1} parent=1 // pred_region
      %27 = vsyncadd [#allocation6], 0
      %s28 = sshll.u32 %s1, 4
      %s29 = int_to_ptr.hbm [resolvable:$true] %s28
      %s30 = sshll.u32 [#allocation5], 4
      %s31 = int_to_ptr.vmem [resolvable:$true] %s30
      %36 = dma.hbm_to_vmem [thread:$0]  %s29, 1024, %s31, [#allocation6], 64, 64, 4
    $region9: #{tpu_custom_call.1} parent=1 // pred_fallthru
      _
    // Predicated region
    $region10: #{tpu_custom_call.1} parent=1 // pred_check
      _
    $region11: #{tpu_custom_call.1} parent=1 // pred_check_branch
      %38 = sbr.rel (0) target = $region13
    $region12: #{tpu_custom_call.1} parent=1 // pred_region
      _
    $region13: #{tpu_custom_call.1} parent=1 // pred_fallthru
      _
    // Predicated region
    $region14: #{tpu_custom_call.1} parent=1 // pred_check
      _
    $region15: #{tpu_custom_call.1} parent=1 // pred_check_branch
      %40 = sbr.rel (0) target = $region17
    $region16: #{tpu_custom_call.1} parent=1 // pred_region
      %42 = vsyncadd [#allocation6], 0
      %s43 = sshll.u32 %s3, 4
      %s44 = int_to_ptr.hbm [resolvable:$true] %s43
      %s45 = sshll.u32 [#allocation7], 4
      %s46 = int_to_ptr.vmem [resolvable:$true] %s45
      %51 = dma.hbm_to_vmem [thread:$0]  %s44, 1024, %s46, [#allocation6], 64, 64, 4
    $region17: #{tpu_custom_call.1} parent=1 // pred_fallthru
      _
    // Predicated region
    $region18: #{tpu_custom_call.1} parent=1 // pred_check
      _
    $region19: #{tpu_custom_call.1} parent=1 // pred_check_branch
      %53 = sbr.rel (0) target = $region21
    $region20: #{tpu_custom_call.1} parent=1 // pred_region
      _
    $region21: #{tpu_custom_call.1} parent=1 // pred_fallthru
      _
    // Predicated region
    $region22: #{tpu_custom_call.1} parent=1 // pred_check
      _
    $region23: #{tpu_custom_call.1} parent=1 // pred_check_branch
      %55 = sbr.rel (0) target = $region25
    $region24: #{tpu_custom_call.1} parent=1 // pred_region
      %57 = dma.done [#allocation3], 64
    $region25: #{tpu_custom_call.1} parent=1 // pred_fallthru
      _
    // Predicated region
    $region26: #{tpu_custom_call.1} parent=1 // pred_check
      _
    $region27: #{tpu_custom_call.1} parent=1 // pred_check_branch
      %59 = sbr.rel (0) target = $region29
    $region28: #{tpu_custom_call.1} parent=1 // pred_region
      %61 = dma.done [#allocation6], 1024
    $region29: #{tpu_custom_call.1} parent=1 // pred_fallthru
      _
    // Predicated region
    $region30: #{tpu_custom_call.1} parent=1 // pred_check
      _
    $region31: #{tpu_custom_call.1} parent=1 // pred_check_branch
      %63 = sbr.rel (0) target = $region33
    $region32: #{tpu_custom_call.1} parent=1 // pred_region
      %65 = dma.done [#allocation6], 1024
    $region33: #{tpu_custom_call.1} parent=1 // pred_fallthru
      _
    %v66 = vld [vmem:[#allocation2] sm:$0xf]
    %v67 = vld [vmem:[#allocation5] sm:$0xf]
    %v68 = vld [vmem:[#allocation5 + $0x4] sm:$0xf]
    %v69 = vld [vmem:[#allocation5 + $0x8] sm:$0xf]
    %v70 = vld [vmem:[#allocation5 + $0xc] sm:$0xf]
    %v71 = vld [vmem:[#allocation5 + $0x10] sm:$0xf]
    %v72 = vld [vmem:[#allocation5 + $0x14] sm:$0xf]
    %v73 = vld [vmem:[#allocation5 + $0x18] sm:$0xf]
    %v74 = vld [vmem:[#allocation5 + $0x1c] sm:$0xf]
    %v75 = vld [vmem:[#allocation5 + $0x20] sm:$0xf]
    %v76 = vld [vmem:[#allocation5 + $0x24] sm:$0xf]
    %v77 = vld [vmem:[#allocation5 + $0x28] sm:$0xf]
    %v78 = vld [vmem:[#allocation5 + $0x2c] sm:$0xf]
    %v79 = vld [vmem:[#allocation5 + $0x30] sm:$0xf]
    %v80 = vld [vmem:[#allocation5 + $0x34] sm:$0xf]
    %v81 = vld [vmem:[#allocation5 + $0x38] sm:$0xf]
    %v82 = vld [vmem:[#allocation5 + $0x3c] sm:$0xf]
    %v83 = vld [vmem:[%s2] sm:$0x1]
    %v85 = vperm.slane %v83, 0
    %v103 = vunpack.c.l.b16 %v67
    %v104 = vunpack.c.l.b16 %v68
    %v105 = vunpack.c.l.b16 %v69
    %v106 = vunpack.c.l.b16 %v70
    %v107 = vunpack.c.l.b16 %v71
    %v108 = vunpack.c.l.b16 %v72
    %v109 = vunpack.c.l.b16 %v73
    %v110 = vunpack.c.l.b16 %v74
    %v111 = vunpack.c.l.b16 %v75
    %v112 = vunpack.c.l.b16 %v76
    %v113 = vunpack.c.l.b16 %v77
    %v114 = vunpack.c.l.b16 %v78
    %v115 = vunpack.c.l.b16 %v79
    %v116 = vunpack.c.l.b16 %v80
    %v117 = vunpack.c.l.b16 %v81
    %v118 = vunpack.c.l.b16 %v82
    %v119 = vpack.c.b16 %v104, %v103
    %v120 = vpack.c.b16 %v106, %v105
    %v121 = vpack.c.b16 %v108, %v107
    %v122 = vpack.c.b16 %v110, %v109
    %v123 = vpack.c.b16 %v112, %v111
    %v124 = vpack.c.b16 %v114, %v113
    %v125 = vpack.c.b16 %v116, %v115
    %v126 = vpack.c.b16 %v118, %v117
    %135 = vmatpush.bf16.msra.mxu0 %v126
    %136 = vmatpush.bf16.msra.mxu0 %v125
    %137 = vmatpush.bf16.msra.mxu0 %v124
    %138 = vmatpush.bf16.msra.mxu0 %v123
    %139 = vmatpush.bf16.msra.mxu0 %v122
    %140 = vmatpush.bf16.msra.mxu0 %v121
    %141 = vmatpush.bf16.msra.mxu0 %v120
    %142 = vmatpush.bf16.msra.mxu0 %v119
    %143 = vmatmul.bf16.gmra.mxu0 %v66
    %v144 = vpop.f32.mrf.mxu0
    %v145 = vadd.f32 %v85, %v144
    %v146 = vpop.f32.mrf.mxu0
    %147 = vdwg.mxu0
    %v148 = vpack.c.bf16 %v145, %v145
    %v149 = vld [vmem:[#allocation7] sm:$0xf]
    %v150 = vld [vmem:[#allocation7 + $0x4] sm:$0xf]
    %v151 = vld [vmem:[#allocation7 + $0x8] sm:$0xf]
    %v152 = vld [vmem:[#allocation7 + $0xc] sm:$0xf]
    %v153 = vld [vmem:[#allocation7 + $0x10] sm:$0xf]
    %v154 = vld [vmem:[#allocation7 + $0x14] sm:$0xf]
    %v155 = vld [vmem:[#allocation7 + $0x18] sm:$0xf]
    %v156 = vld [vmem:[#allocation7 + $0x1c] sm:$0xf]
    %v157 = vld [vmem:[#allocation7 + $0x20] sm:$0xf]
    %v158 = vld [vmem:[#allocation7 + $0x24] sm:$0xf]
    %v159 = vld [vmem:[#allocation7 + $0x28] sm:$0xf]
    %v160 = vld [vmem:[#allocation7 + $0x2c] sm:$0xf]
    %v161 = vld [vmem:[#allocation7 + $0x30] sm:$0xf]
    %v162 = vld [vmem:[#allocation7 + $0x34] sm:$0xf]
    %v163 = vld [vmem:[#allocation7 + $0x38] sm:$0xf]
    %v164 = vld [vmem:[#allocation7 + $0x3c] sm:$0xf]
    %v165 = vld [vmem:[%s4] sm:$0x1]
    %v167 = vperm.slane %v165, 0
    %v185 = vunpack.c.l.b16 %v149
    %v186 = vunpack.c.l.b16 %v150
    %v187 = vunpack.c.l.b16 %v151
    %v188 = vunpack.c.l.b16 %v152
    %v189 = vunpack.c.l.b16 %v153
    %v190 = vunpack.c.l.b16 %v154
    %v191 = vunpack.c.l.b16 %v155
    %v192 = vunpack.c.l.b16 %v156
    %v193 = vunpack.c.l.b16 %v157
    %v194 = vunpack.c.l.b16 %v158
    %v195 = vunpack.c.l.b16 %v159
    %v196 = vunpack.c.l.b16 %v160
    %v197 = vunpack.c.l.b16 %v161
    %v198 = vunpack.c.l.b16 %v162
    %v199 = vunpack.c.l.b16 %v163
    %v200 = vunpack.c.l.b16 %v164
    %v201 = vpack.c.b16 %v186, %v185
    %v202 = vpack.c.b16 %v188, %v187
    %v203 = vpack.c.b16 %v190, %v189
    %v204 = vpack.c.b16 %v192, %v191
    %v205 = vpack.c.b16 %v194, %v193
    %v206 = vpack.c.b16 %v196, %v195
    %v207 = vpack.c.b16 %v198, %v197
    %v208 = vpack.c.b16 %v200, %v199
    %217 = vmatpush.bf16.msra.mxu0 %v208
    %218 = vmatpush.bf16.msra.mxu0 %v207
    %219 = vmatpush.bf16.msra.mxu0 %v206
    %220 = vmatpush.bf16.msra.mxu0 %v205
    %221 = vmatpush.bf16.msra.mxu0 %v204
    %222 = vmatpush.bf16.msra.mxu0 %v203
    %223 = vmatpush.bf16.msra.mxu0 %v202
    %224 = vmatpush.bf16.msra.mxu0 %v201
    %225 = vmatmul.bf16.gmra.mxu0 %v148
    %v226 = vpop.f32.mrf.mxu0
    %v227 = vadd.f32 %v167, %v226
    %v228 = vpop.f32.mrf.mxu0
    %229 = vdwg.mxu0
    %230 = vst [vmem:[#allocation8] sm:$0xff] %v227
    // Predicated region
    $region34: #{tpu_custom_call.1} parent=1 // pred_check
      _
    $region35: #{tpu_custom_call.1} parent=1 // pred_check_branch
      %232 = sbr.rel (0) target = $region37
    $region36: #{tpu_custom_call.1} parent=1 // pred_region
      %234 = vsyncadd [#allocation4], 0
      %s236 = sshll.u32 [#allocation8], 4
      %s237 = int_to_ptr.vmem [resolvable:$true] %s236
      %s238 = sshll.u32 %s5, 4
      %s239 = int_to_ptr.hbm [resolvable:$true] %s238
      %241 = dma.vmem_to_hbm [thread:$0]  %s237, 128, %s239, [#allocation4]
    $region37: #{tpu_custom_call.1} parent=1 // pred_fallthru
      _
    // Predicated region
    $region38: #{tpu_custom_call.1} parent=1 // pred_check
      _
    $region39: #{tpu_custom_call.1} parent=1 // pred_check_branch
      %243 = sbr.rel (0) target = $region41
    $region40: #{tpu_custom_call.1} parent=1 // pred_region
      %245 = dma.done [#allocation4], 128
    $region41: #{tpu_custom_call.1} parent=1 // pred_fallthru
      _
    %246 = vsyncpa [#allocation3], 1
    %247 = vsyncpa [#allocation6], 1
    %248 = vsyncpa [#allocation4], 1

</llo_original>
